<compile_context>
chip_gen: v6e
topology: v6e:2x2x1
jax: 0.10.0
libtpu: 0.0.40
codegen_flags: <defaults>
</compile_context>

<pallas_src>
import functools

import numpy as np
import jax
import jax.numpy as jnp
from jax.experimental import pallas as pl
from jax.experimental.pallas import tpu as pltpu


_LANE = 128          # TPU lane width; pad class dim up to this for dense stores
_NEG_BIG = -1e30     # finite "-inf" for masking padded softmax columns


# ----------------------------- glue (plain JAX / numpy) -----------------------

def l2_norm(x):
    """Row-wise L2 normalization (matches the reference l2_norm semantics)."""
    nrm = jnp.sqrt(jnp.sum(x * x, axis=-1, keepdims=True))
    return x / jnp.maximum(nrm, 1e-12)


def flatten_feature_map(x):
    """(b, n, h, w) -> (b, h*w, n): one row per spatial location (as in infer())."""
    b, n, h, w = x.shape
    return jnp.transpose(x.reshape(b, n, h * w), (0, 2, 1))


def binarize_labels(labels):
    """One-hot binarization over the unique labels (numpy, setup-time only)."""
    labels = np.asarray(labels)
    unique_labels = np.unique(labels)
    binarized = np.zeros((labels.shape[0], len(unique_labels)), dtype=np.float32)
    for i, label in enumerate(labels):
        binarized[i, np.where(unique_labels == label)[0]] = 1.0
    return binarized


def solve_exact(embedding_collection, labels_bin):
    """W = pinv(collection) @ labels_bin  (setup-time, plain JAX)."""
    collection_inverse = jnp.linalg.pinv(embedding_collection)
    return collection_inverse @ labels_bin  # (D, C)


# ----------------------------- Pallas kernel ----------------------------------

def _exact_solution_kernel(x_ref, w_ref, o_ref, *, num_classes):
    # (bn, D) @ (D, C_pad) on the MXU, f32 accumulation.
    logits = jnp.dot(x_ref[...], w_ref[...], preferred_element_type=jnp.float32)
    # torch.where(out > 1, 2 - out, out)
    logits = jnp.where(logits > 1.0, 2.0 - logits, logits)
    # Mask the lane-padded (fake) classes so they do not perturb the softmax.
    col = jax.lax.broadcasted_iota(jnp.int32, logits.shape, 1)
    logits = jnp.where(col < num_classes, logits, _NEG_BIG)
    # Numerically stable softmax along the (lane-dense, padded) class dim.
    m = jnp.max(logits, axis=-1, keepdims=True)
    e = jnp.exp(logits - m)
    denom = jnp.sum(e, axis=-1, keepdims=True)
    # Exact reciprocal: approx=True (EUP vrcp) can brush the 1e-5 tolerance.
    o_ref[...] = (e * pl.reciprocal(denom, approx=False)).astype(o_ref.dtype)


def _choose_block_rows(n, max_bn=1024):
    """Row-tile size: multiple of 8 (f32 sublane), >=2 grid steps when possible,
    capped so double-buffered (bn, D) + (bn, 128) blocks stay tiny vs VMEM."""
    bn = min(max_bn, max(1, (n + 1) // 2))
    return max(8, ((bn + 7) // 8) * 8)


def exact_solution_forward(embedding, W, *, max_block_rows=1024):
    """embedding: (N, D) f32, W: (D, C) f32 -> (N, C) f32 softmax probs."""
    N, D = embedding.shape
    Dw, C = W.shape
    assert D == Dw

    # Lane-dense class dim: pad C up to a multiple of 128 (zeros; masked in-kernel).
    c_pad = max(_LANE, ((C + _LANE - 1) // _LANE) * _LANE)
    w_pad = jnp.zeros((D, c_pad), dtype=jnp.float32).at[:, :C].set(W)

    # Tile over N.
    bn = _choose_block_rows(N, max_block_rows)
    n_pad = ((N + bn - 1) // bn) * bn
    x = embedding.astype(jnp.float32)
    if n_pad != N:
        x = jnp.zeros((n_pad, D), dtype=jnp.float32).at[:N, :].set(x)

    grid = (n_pad // bn,)
    out = pl.pallas_call(
        functools.partial(_exact_solution_kernel, num_classes=C),
        out_shape=jax.ShapeDtypeStruct((n_pad, c_pad), jnp.float32),
        grid=grid,
        in_specs=[
            pl.BlockSpec((bn, D), lambda i: (i, 0)),       # embedding rows, pipelined
            pl.BlockSpec((D, c_pad), lambda i: (0, 0)),    # W resident across steps
        ],
        out_specs=pl.BlockSpec((bn, c_pad), lambda i: (i, 0)),
        compiler_params=pltpu.CompilerParams(
            dimension_semantics=("parallel",),             # N steps are independent
        ),
    )(x, w_pad)
    return out[:N, :C]


# ----------------------------- reference (pure JAX) ----------------------------

def exact_solution_forward_ref(embedding, W):
    out = embedding @ W
    out = jnp.where(out > 1.0, 2.0 - out, out)
    return jax.nn.softmax(out, axis=-1)


# ----------------------------- main --------------------------------------------

if __name__ == "__main__":
    key = jax.random.PRNGKey(0)
    k_coll, k_query = jax.random.split(key)

    # "Training" collection: 16 embeddings of dim 32, binary labels.
    num_collection, embed_dim = 16, 32
    labels_int = np.array([0, 1] * (num_collection // 2), dtype=np.int64)

    embedding_collection = jax.random.normal(
        k_coll, (num_collection, embed_dim), dtype=jnp.float32)
    embedding_collection = l2_norm(embedding_collection).astype(jnp.float32)

    labels_bin = jnp.asarray(binarize_labels(labels_int))      # (16, 2)
    W = solve_exact(embedding_collection, labels_bin)           # (32, 2)
    W = jnp.asarray(W, dtype=jnp.float32)

    # Query feature map (b, n, h, w) as in infer(): flatten + l2-normalize.
    b, h, w = 1, 16, 16
    query_features = jax.random.normal(
        k_query, (b, embed_dim, h, w), dtype=jnp.float32)
    query = l2_norm(flatten_feature_map(query_features))[0]     # (256, 32)
    query = query.astype(jnp.float32)

    out = exact_solution_forward(query, W)
    out = jax.block_until_ready(out)

    ref = exact_solution_forward_ref(query, W)
    np.testing.assert_allclose(np.asarray(out), np.asarray(ref),
                               rtol=1e-5, atol=1e-5)

    print("KERNEL_OK")
</pallas_src>

<mosaic_0001>
module attributes {stable_mosaic.version = 11 : i64} {
  func.func @_exact_solution_kernel(%arg0: i32, %arg1: memref<128x32xf32, #tpu.memory_space<vmem>>, %arg2: memref<32x128xf32, #tpu.memory_space<vmem>>, %arg3: memref<128x128xf32, #tpu.memory_space<vmem>>) attributes {dimension_semantics = [#tpu.dimension_semantics<parallel>], iteration_bounds = array<i64: 2>, scalar_prefetch = 0 : i64, scratch_operands = 0 : i64, tpu.core_type = #tpu.core_type<tc>, window_params = [{transform_indices = @transform_0, window_bounds = array<i64: 128, 32>}, {pipeline_mode = #tpu.pipeline_mode<synchronous>, transform_indices = @transform_1, window_bounds = array<i64: 32, 128>}, {transform_indices = @transform_2, window_bounds = array<i64: 128, 128>}]} {
    %c0 = arith.constant 0 : index
    %c0_0 = arith.constant 0 : index
    %0 = vector.load %arg1[%c0, %c0_0] : memref<128x32xf32, #tpu.memory_space<vmem>>, vector<128x32xf32>
    %c0_1 = arith.constant 0 : index
    %c0_2 = arith.constant 0 : index
    %1 = vector.load %arg2[%c0_1, %c0_2] : memref<32x128xf32, #tpu.memory_space<vmem>>, vector<32x128xf32>
    %cst = arith.constant dense<0.000000e+00> : vector<128x128xf32>
    %2 = tpu.matmul %0, %1, %cst {dimension_numbers = #tpu.dot_dimension_numbers<[1], [0], [0], [1], [0, 0, 1, 1], [], []>} : vector<128x32xf32>, vector<32x128xf32>, vector<128x128xf32> -> vector<128x128xf32>
    %cst_3 = arith.constant 1.000000e+00 : f32
    %3 = vector.broadcast %cst_3 : f32 to vector<128x128xf32>
    %4 = arith.cmpf ogt, %2, %3 : vector<128x128xf32>
    %cst_4 = arith.constant 2.000000e+00 : f32
    %5 = vector.broadcast %cst_4 : f32 to vector<128x128xf32>
    %6 = arith.subf %5, %2 : vector<128x128xf32>
    %7 = arith.select %4, %6, %2 : vector<128x128xi1>, vector<128x128xf32>
    %8 = tpu.iota {dimensions = array<i32: 1>} : vector<128x128xi32>
    %c2_i32 = arith.constant 2 : i32
    %9 = vector.broadcast %c2_i32 : i32 to vector<128x128xi32>
    %10 = arith.cmpi slt, %8, %9 : vector<128x128xi32>
    %cst_5 = arith.constant -1.000000e+30 : f32
    %11 = vector.broadcast %cst_5 : f32 to vector<128x128xf32>
    %12 = arith.select %10, %7, %11 : vector<128x128xi1>, vector<128x128xf32>
    %cst_6 = arith.constant dense<0xFF800000> : vector<128xf32>
    %13 = vector.multi_reduction <maximumf>, %12, %cst_6 [1] : vector<128x128xf32> to vector<128xf32>
    %14 = vector.shape_cast %13 : vector<128xf32> to vector<128x1xf32>
    %15 = vector.broadcast %14 : vector<128x1xf32> to vector<128x128xf32>
    %16 = arith.subf %12, %15 : vector<128x128xf32>
    %17 = math.exp %16 : vector<128x128xf32>
    %cst_7 = arith.constant dense<0.000000e+00> : vector<128xf32>
    %18 = vector.multi_reduction <add>, %17, %cst_7 [1] : vector<128x128xf32> to vector<128xf32>
    %19 = vector.shape_cast %18 : vector<128xf32> to vector<128x1xf32>
    %20 = tpu.reciprocal %19 : vector<128x1xf32> -> vector<128x1xf32>
    %21 = vector.broadcast %20 : vector<128x1xf32> to vector<128x128xf32>
    %22 = arith.mulf %17, %21 : vector<128x128xf32>
    %c0_8 = arith.constant 0 : index
    %c0_9 = arith.constant 0 : index
    %23 = vector.load %arg3[%c0_8, %c0_9] : memref<128x128xf32, #tpu.memory_space<vmem>>, vector<128x128xf32>
    tpu.vector_store %arg3[%c0_8, %c0_9], %22 {strides = array<i32>} : memref<128x128xf32, #tpu.memory_space<vmem>>, vector<128x128xf32>,
    return
  }
  func.func @transform_0(%arg0: i32) -> (i32, i32) {
    %c0_i32 = arith.constant 0 : i32
    %c0_i32_0 = arith.constant 0 : i32
    return %arg0, %c0_i32 : i32, i32
  }
  func.func @transform_1(%arg0: i32) -> (i32, i32) {
    %c0_i32 = arith.constant 0 : i32
    %c0_i32_0 = arith.constant 0 : i32
    %c0_i32_1 = arith.constant 0 : i32
    return %c0_i32, %c0_i32_0 : i32, i32
  }
  func.func @transform_2(%arg0: i32) -> (i32, i32) {
    %c0_i32 = arith.constant 0 : i32
    %c0_i32_0 = arith.constant 0 : i32
    return %arg0, %c0_i32 : i32, i32
  }
}

</mosaic_0001>

<llo_original>
// kernel: tpu_custom_call.1
$region0: #{tpu_custom_call.1}
  #allocation0 [shape = 'u32[]', space=smem, size = 0x4, offset = 0x4, fixed_abs, tag = 'smem constant byte address 0x4 - core index']
  #allocation1 [shape = 'u32[144,128]{1,0:T(1,128)}', space=vmem, size = 0x12000, scoped, tag = 'internal scratch']
  %s0 = inlined_call_operand.vmem [shape: f32[256,32], index: 0, kind: input, shape index: {}]
  %s1 = inlined_call_operand.vmem [shape: f32[32,128], index: 1, kind: input, shape index: {}]
  %s2 = inlined_call_operand.hbm [shape: f32[256,128], index: 2, kind: output, shape index: {}]
  %s3 = sld [smem:[#allocation0]]
  $region41: #{tpu_custom_call.1} parent=0
    _
  %s5 = ssub.s32 1, %s3
  %s6 = scalar_select 0, %s5, %s3
  $region1: #{tpu_custom_call.1} parent=0
    #allocation2 [shape = 'u8[131072]{0}', space=vmem, size = 0x20000, scoped, tag = 'output window, operand 0']
    #allocation3 [shape = 's32[2]{0}', space=sflag, size = 0x8, scoped, tag = 'scoped memory for tpu_custom_call.1']
    %7 = vsyncpa [#allocation3], 0
    %s8 = scalar_lea.sflag [#allocation3], 1
    %9 = vsyncpa %s8, 0
    loop: start=0, step=1, limit=4
    $region2: #{tpu_custom_call.1} parent=1 // loop_pre_header
      _
    $region3: #{tpu_custom_call.1} parent=1 // loop_header
      %s11 = sphi 0, %s15
      %p12 = scmp.ge.s32.totalorder %s11, 4
      %s21 = sphi 0, %s23
      %s24 = sphi 0, %s21
      %s25 = sphi 0, %s24
      %s41 = sphi 0, %s25
      %s45 = sphi 0, %s45
      %s47 = sphi 0, %s45
      %s48 = sphi 0, %s47
      %s62 = sphi 0, %s48
      %s68 = sphi 0, %s70
      %s71 = sphi 0, %s68
      %s72 = sphi 0, %s71
      %s88 = sphi 0, %s72
    $region4: #{tpu_custom_call.1} parent=1 // loop_header_branch
      %14 = sbr.rel (%p12) target = $region8
    $region5: #{tpu_custom_call.1} parent=1 // loop_body
      %s16 = ssub.s32 %s11, 1
      %s17 = ssub.s32 %s11, 2
      %s18 = sadd.s32 %s11, 1
      %s19 = ssub.s32 %s11, %s18
      %p20 = scmp.eq.s32.totalorder %s19, 0
      %s22 = sadd.s32 %s21, 1
      %s23 = scalar_select %p20, %s21, %s22
      %p26 = pneg %p20
      %p27 = scmp.eq.s32.totalorder %s11, 1
      %p28 = por %p26, %p27
      %p29 = scmp.ne.s32.totalorder %s21, %s24
      %p30 = scmp.eq.s32.totalorder %s11, 0
      %p31 = por %p29, %p30
      %p32 = scmp.ne.s32.totalorder %s21, %s24
      %p33 = scmp.eq.s32.totalorder %s16, 1
      %p34 = por %p32, %p33
      %p35 = scmp.ne.s32.totalorder %s24, %s25
      %p36 = scmp.eq.s32.totalorder %s16, 0
      %p37 = por %p35, %p36
      %p38 = scmp.ne.s32.totalorder %s24, %s25
      %p39 = scmp.eq.s32.totalorder %s17, 1
      %p40 = por %p38, %p39
      %p42 = scmp.ne.s32.totalorder %s25, %s41
      %p43 = scmp.eq.s32.totalorder %s17, 0
      %p44 = por %p42, %p43
      %s46 = sadd.s32 %s45, 1
      %p49 = scmp.eq.s32.totalorder %s11, 1
      %p50 = scmp.ne.s32.totalorder %s45, %s47
      %p51 = scmp.eq.s32.totalorder %s11, 0
      %p52 = por %p50, %p51
      %p53 = scmp.ne.s32.totalorder %s45, %s47
      %p54 = scmp.eq.s32.totalorder %s16, 1
      %p55 = por %p53, %p54
      %p56 = scmp.ne.s32.totalorder %s47, %s48
      %p57 = scmp.eq.s32.totalorder %s16, 0
      %p58 = por %p56, %p57
      %p59 = scmp.ne.s32.totalorder %s47, %s48
      %p60 = scmp.eq.s32.totalorder %s17, 1
      %p61 = por %p59, %p60
      %p63 = scmp.ne.s32.totalorder %s48, %s62
      %p64 = scmp.eq.s32.totalorder %s17, 0
      %p65 = por %p63, %p64
      %s66 = ssub.s32 %s11, %s18
      %p67 = scmp.eq.s32.totalorder %s66, 0
      %s69 = sadd.s32 %s68, 1
      %s70 = scalar_select %p67, %s68, %s69
      %p73 = pneg %p67
      %p74 = scmp.eq.s32.totalorder %s11, 1
      %p75 = por %p73, %p74
      %p76 = scmp.ne.s32.totalorder %s68, %s71
      %p77 = scmp.eq.s32.totalorder %s11, 0
      %p78 = por %p76, %p77
      %p79 = scmp.ne.s32.totalorder %s68, %s71
      %p80 = scmp.eq.s32.totalorder %s16, 1
      %p81 = por %p79, %p80
      %p82 = scmp.ne.s32.totalorder %s71, %s72
      %p83 = scmp.eq.s32.totalorder %s16, 0
      %p84 = por %p82, %p83
      %p85 = scmp.ne.s32.totalorder %s71, %s72
      %p86 = scmp.eq.s32.totalorder %s17, 1
      %p87 = por %p85, %p86
      %p89 = scmp.ne.s32.totalorder %s72, %s88
      %p90 = scmp.eq.s32.totalorder %s17, 0
      %p91 = por %p89, %p90
      %p92 = scmp.le.s32.totalorder 1, %s11
      %p93 = scmp.lt.s32.totalorder %s11, 3
      %p94 = pnand %p92, %p93
      %p95 = pneg %p94
      // Predicated region
      $region9: #{tpu_custom_call.1} parent=5 // pred_check
        _
      $region10: #{tpu_custom_call.1} parent=5 // pred_check_branch
        %97 = sbr.rel (%p94) target = $region12
      $region11: #{tpu_custom_call.1} parent=5 // pred_region
        %s98 = ssub.s32 %s11, 1
        // Predicated region
        $region13: #{tpu_custom_call.1} parent=11 // pred_check
          %p99 = pneg %p58
        $region14: #{tpu_custom_call.1} parent=11 // pred_check_branch
          %101 = sbr.rel (%p99) target = $region16
        $region15: #{tpu_custom_call.1} parent=11 // pred_region
          _
        $region16: #{tpu_custom_call.1} parent=11 // pred_fallthru
          _
      $region12: #{tpu_custom_call.1} parent=5 // pred_fallthru
        _
      %p102 = scmp.lt.s32.totalorder %s11, 2
      // Predicated region
      $region17: #{tpu_custom_call.1} parent=5 // pred_check
        %p103 = pneg %p102
      $region18: #{tpu_custom_call.1} parent=5 // pred_check_branch
        %105 = sbr.rel (%p103) target = $region20
      $region19: #{tpu_custom_call.1} parent=5 // pred_region
        // Predicated region
        $region21: #{tpu_custom_call.1} parent=19 // pred_check
          %p106 = pneg %p31
        $region22: #{tpu_custom_call.1} parent=19 // pred_check_branch
          %108 = sbr.rel (%p106) target = $region24
        $region23: #{tpu_custom_call.1} parent=19 // pred_region
          %s109 = smul.u32 16, %s11
          %p110 = scmp.lt.s32.totalorder %s109, 31
          %s111 = scalar_select %p110, %s109, 31
          %s112 = smul.addr %s111, 8
          %s113 = scalar_lea.vmem %s0, %s112
          %s114 = smul.u32 16, %s11
        $region24: #{tpu_custom_call.1} parent=19 // pred_fallthru
          _
      $region20: #{tpu_custom_call.1} parent=5 // pred_fallthru
        _
      %p115 = scmp.le.s32.totalorder 1, %s11
      %p116 = scmp.lt.s32.totalorder %s11, 3
      %p117 = pnand %p115, %p116
      %p118 = pneg %p117
      // Predicated region
      $region25: #{tpu_custom_call.1} parent=5 // pred_check
        _
      $region26: #{tpu_custom_call.1} parent=5 // pred_check_branch
        %120 = sbr.rel (%p117) target = $region28
      $region27: #{tpu_custom_call.1} parent=5 // pred_region
        %s121 = ssub.s32 %s11, 1
        %s122 = smul.u32 16, %s16
        %p123 = scmp.lt.s32.totalorder %s122, 31
        %s124 = scalar_select %p123, %s122, 31
        %s125 = smul.addr %s124, 8
        %s126 = scalar_lea.vmem %s0, %s125
        %p127 = pneg %p37
        %p128 = pneg %p34
        %p129 = pneg %p58
        %p130 = pneg %p55
        %p131 = pneg %p84
        %p132 = pneg %p81
        %s133 = sand.u32 %s71, 1
        %s134 = scalar_lea.sflag [#allocation3], %s133
        %s135 = sand.u32 %s71, 1
        %s136 = smul.addr %s135, 128
        %s137 = scalar_lea.vmem [#allocation2], %s136
        %s138 = smul.u32 16, %s16
        %p139 = scmp.lt.s32.totalorder %s138, 31
        %s140 = scalar_select %p139, %s138, 31
        %s141 = smul.addr %s140, 8
        %s142 = scalar_lea.vmem %s0, %s141
        %s143 = smul.u32 16, %s16
        %s144 = smul.u32 16, %s16
        %v145 = vld [vmem:[%s142] sm:$0xff]
        %v146 = vld [vmem:[%s142 + $0x8] sm:$0xff]
        %v147 = vld [vmem:[%s142 + $0x10] sm:$0xff]
        %v148 = vld [vmem:[%s142 + $0x18] sm:$0xff]
        %v149 = vld [vmem:[%s142 + $0x20] sm:$0xff]
        %v150 = vld [vmem:[%s142 + $0x28] sm:$0xff]
        %v151 = vld [vmem:[%s142 + $0x30] sm:$0xff]
        %v152 = vld [vmem:[%s142 + $0x38] sm:$0xff]
        %v153 = vld [vmem:[%s142 + $0x40] sm:$0xff]
        %v154 = vld [vmem:[%s142 + $0x48] sm:$0xff]
        %v155 = vld [vmem:[%s142 + $0x50] sm:$0xff]
        %v156 = vld [vmem:[%s142 + $0x58] sm:$0xff]
        %v157 = vld [vmem:[%s142 + $0x60] sm:$0xff]
        %v158 = vld [vmem:[%s142 + $0x68] sm:$0xff]
        %v159 = vld [vmem:[%s142 + $0x70] sm:$0xff]
        %v160 = vld [vmem:[%s142 + $0x78] sm:$0xff]
        %v161 = vld [vmem:[%s1] sm:$0xff]
        %v162 = vld [vmem:[%s1 + $0x8] sm:$0xff]
        %v163 = vld [vmem:[%s1 + $0x10] sm:$0xff]
        %v164 = vld [vmem:[%s1 + $0x18] sm:$0xff]
        %vm165 = vcmask 261120
        %v167 = vsel %vm165, %v145, 0
        %v170 = vsel %vm165, %v146, 0
        %v173 = vsel %vm165, %v147, 0
        %v176 = vsel %vm165, %v148, 0
        %v179 = vsel %vm165, %v149, 0
        %v182 = vsel %vm165, %v150, 0
        %v185 = vsel %vm165, %v151, 0
        %v188 = vsel %vm165, %v152, 0
        %v191 = vsel %vm165, %v153, 0
        %v194 = vsel %vm165, %v154, 0
        %v197 = vsel %vm165, %v155, 0
        %v200 = vsel %vm165, %v156, 0
        %v203 = vsel %vm165, %v157, 0
        %v206 = vsel %vm165, %v158, 0
        %v209 = vsel %vm165, %v159, 0
        %v212 = vsel %vm165, %v160, 0
        %214 = vmatprep.subr.mxu0 0.0
        %215 = vmatpush1.msra.mxu0 0.0
        %216 = vmatprep.subr.mxu0 0.0
        %217 = vmatpush1.msra.mxu0 0.0
        %218 = vmatprep.subr.mxu0 0.0
        %219 = vmatpush1.msra.mxu0 0.0
        %220 = vmatprep.subr.mxu0 0.0
        %221 = vmatpush1.msra.mxu0 0.0
        %222 = vmatprep.subr.mxu0 0.0
        %223 = vmatpush1.msra.mxu0 0.0
        %224 = vmatprep.subr.mxu0 0.0
        %225 = vmatpush1.msra.mxu0 0.0
        %226 = vmatprep.subr.mxu0 0.0
        %227 = vmatpush1.msra.mxu0 0.0
        %228 = vmatprep.subr.mxu0 0.0
        %229 = vmatpush1.msra.mxu0 0.0
        %230 = vmatprep.subr.mxu0 0.0
        %231 = vmatpush1.msra.mxu0 0.0
        %232 = vmatprep.subr.mxu0 0.0
        %233 = vmatpush1.msra.mxu0 0.0
        %234 = vmatprep.subr.mxu0 0.0
        %235 = vmatpush1.msra.mxu0 0.0
        %236 = vmatprep.subr.mxu0 0.0
        %237 = vmatpush1.msra.mxu0 0.0
        %238 = vmatprep.subr.mxu0 0.0
        %239 = vmatpush1.msra.mxu0 %v164
        %240 = vmatprep.subr.mxu0 0.0
        %241 = vmatpush1.msra.mxu0 %v163
        %242 = vmatprep.subr.mxu0 0.0
        %243 = vmatpush1.msra.mxu0 %v162
        %244 = vmatprep.subr.mxu0 0.0
        %245 = vmatpush1.msra.mxu0 %v161
        %246 = vmatprep.subr.mxu0 0.0
        %247 = vmatpush2.msra.mxu0 0.0
        %248 = vmatprep.subr.mxu0 0.0
        %249 = vmatpush2.msra.mxu0 0.0
        %250 = vmatprep.subr.mxu0 0.0
        %251 = vmatpush2.msra.mxu0 0.0
        %252 = vmatprep.subr.mxu0 0.0
        %253 = vmatpush2.msra.mxu0 0.0
        %254 = vmatprep.subr.mxu0 0.0
        %255 = vmatpush2.msra.mxu0 0.0
        %256 = vmatprep.subr.mxu0 0.0
        %257 = vmatpush2.msra.mxu0 0.0
        %258 = vmatprep.subr.mxu0 0.0
        %259 = vmatpush2.msra.mxu0 0.0
        %260 = vmatprep.subr.mxu0 0.0
        %261 = vmatpush2.msra.mxu0 0.0
        %262 = vmatprep.subr.mxu0 0.0
        %263 = vmatpush2.msra.mxu0 0.0
        %264 = vmatprep.subr.mxu0 0.0
        %265 = vmatpush2.msra.mxu0 0.0
        %266 = vmatprep.subr.mxu0 0.0
        %267 = vmatpush2.msra.mxu0 0.0
        %268 = vmatprep.subr.mxu0 0.0
        %269 = vmatpush2.msra.mxu0 0.0
        %270 = vmatprep.subr.mxu0 0.0
        %271 = vmatpush2.msra.mxu0 0.0
        %272 = vmatprep.subr.mxu0 0.0
        %273 = vmatpush2.msra.mxu0 0.0
        %274 = vmatprep.subr.mxu0 0.0
        %275 = vmatpush2.msra.mxu0 0.0
        %276 = vmatprep.subr.mxu0 0.0
        %277 = vmatpush2.msra.mxu0 0.0
        %278 = vmatprep.mubr.f32.mxu0 0.0
        %279 = vmatmul.mubr.f32.gmra.mxu0 %v167
        %v280 = vpop.f32.mrf.mxu0
        %v281 = vadd.f32 0.0, %v280
        %v282 = vpop.f32.mrf.mxu0
        %283 = vmatprep.mubr.f32.mxu0 0.0
        %284 = vmatmul.mubr.f32.gmra.mxu0 %v170
        %v285 = vpop.f32.mrf.mxu0
        %v286 = vadd.f32 0.0, %v285
        %v287 = vpop.f32.mrf.mxu0
        %288 = vmatprep.mubr.f32.mxu0 0.0
        %289 = vmatmul.mubr.f32.gmra.mxu0 %v173
        %v290 = vpop.f32.mrf.mxu0
        %v291 = vadd.f32 0.0, %v290
        %v292 = vpop.f32.mrf.mxu0
        %293 = vmatprep.mubr.f32.mxu0 0.0
        %294 = vmatmul.mubr.f32.gmra.mxu0 %v176
        %v295 = vpop.f32.mrf.mxu0
        %v296 = vadd.f32 0.0, %v295
        %v297 = vpop.f32.mrf.mxu0
        %298 = vmatprep.mubr.f32.mxu0 0.0
        %299 = vmatmul.mubr.f32.gmra.mxu0 %v179
        %v300 = vpop.f32.mrf.mxu0
        %v301 = vadd.f32 0.0, %v300
        %v302 = vpop.f32.mrf.mxu0
        %303 = vmatprep.mubr.f32.mxu0 0.0
        %304 = vmatmul.mubr.f32.gmra.mxu0 %v182
        %v305 = vpop.f32.mrf.mxu0
        %v306 = vadd.f32 0.0, %v305
        %v307 = vpop.f32.mrf.mxu0
        %308 = vmatprep.mubr.f32.mxu0 0.0
        %309 = vmatmul.mubr.f32.gmra.mxu0 %v185
        %v310 = vpop.f32.mrf.mxu0
        %v311 = vadd.f32 0.0, %v310
        %v312 = vpop.f32.mrf.mxu0
        %313 = vmatprep.mubr.f32.mxu0 0.0
        %314 = vmatmul.mubr.f32.gmra.mxu0 %v188
        %v315 = vpop.f32.mrf.mxu0
        %v316 = vadd.f32 0.0, %v315
        %v317 = vpop.f32.mrf.mxu0
        %318 = vmatprep.mubr.f32.mxu0 0.0
        %319 = vmatmul.mubr.f32.gmra.mxu0 %v191
        %v320 = vpop.f32.mrf.mxu0
        %v321 = vadd.f32 0.0, %v320
        %v322 = vpop.f32.mrf.mxu0
        %323 = vmatprep.mubr.f32.mxu0 0.0
        %324 = vmatmul.mubr.f32.gmra.mxu0 %v194
        %v325 = vpop.f32.mrf.mxu0
        %v326 = vadd.f32 0.0, %v325
        %v327 = vpop.f32.mrf.mxu0
        %328 = vmatprep.mubr.f32.mxu0 0.0
        %329 = vmatmul.mubr.f32.gmra.mxu0 %v197
        %v330 = vpop.f32.mrf.mxu0
        %v331 = vadd.f32 0.0, %v330
        %v332 = vpop.f32.mrf.mxu0
        %333 = vmatprep.mubr.f32.mxu0 0.0
        %334 = vmatmul.mubr.f32.gmra.mxu0 %v200
        %v335 = vpop.f32.mrf.mxu0
        %v336 = vadd.f32 0.0, %v335
        %v337 = vpop.f32.mrf.mxu0
        %338 = vmatprep.mubr.f32.mxu0 0.0
        %339 = vmatmul.mubr.f32.gmra.mxu0 %v203
        %v340 = vpop.f32.mrf.mxu0
        %v341 = vadd.f32 0.0, %v340
        %v342 = vpop.f32.mrf.mxu0
        %343 = vmatprep.mubr.f32.mxu0 0.0
        %344 = vmatmul.mubr.f32.gmra.mxu0 %v206
        %v345 = vpop.f32.mrf.mxu0
        %v346 = vadd.f32 0.0, %v345
        %v347 = vpop.f32.mrf.mxu0
        %348 = vmatprep.mubr.f32.mxu0 0.0
        %349 = vmatmul.mubr.f32.gmra.mxu0 %v209
        %v350 = vpop.f32.mrf.mxu0
        %v351 = vadd.f32 0.0, %v350
        %v352 = vpop.f32.mrf.mxu0
        %353 = vmatprep.mubr.f32.mxu0 0.0
        %354 = vmatmul.mubr.f32.gmra.mxu0 %v212
        %v355 = vpop.f32.mrf.mxu0
        %v356 = vadd.f32 0.0, %v355
        %v357 = vpop.f32.mrf.mxu0
        %358 = vdwg.mxu0
        %vm359 = vcmp.gt.f32.partialorder %v281, 1.0
        %vm360 = vcmp.gt.f32.partialorder %v286, 1.0
        %vm361 = vcmp.gt.f32.partialorder %v291, 1.0
        %vm362 = vcmp.gt.f32.partialorder %v296, 1.0
        %vm363 = vcmp.gt.f32.partialorder %v301, 1.0
        %vm364 = vcmp.gt.f32.partialorder %v306, 1.0
        %vm365 = vcmp.gt.f32.partialorder %v311, 1.0
        %vm366 = vcmp.gt.f32.partialorder %v316, 1.0
        %vm367 = vcmp.gt.f32.partialorder %v321, 1.0
        %vm368 = vcmp.gt.f32.partialorder %v326, 1.0
        %vm369 = vcmp.gt.f32.partialorder %v331, 1.0
        %vm370 = vcmp.gt.f32.partialorder %v336, 1.0
        %vm371 = vcmp.gt.f32.partialorder %v341, 1.0
        %vm372 = vcmp.gt.f32.partialorder %v346, 1.0
        %vm373 = vcmp.gt.f32.partialorder %v351, 1.0
        %vm374 = vcmp.gt.f32.partialorder %v356, 1.0
        %v375 = vsub.f32 2.0, %v281
        %v376 = vsub.f32 2.0, %v286
        %v377 = vsub.f32 2.0, %v291
        %v378 = vsub.f32 2.0, %v296
        %v379 = vsub.f32 2.0, %v301
        %v380 = vsub.f32 2.0, %v306
        %v381 = vsub.f32 2.0, %v311
        %v382 = vsub.f32 2.0, %v316
        %v383 = vsub.f32 2.0, %v321
        %v384 = vsub.f32 2.0, %v326
        %v385 = vsub.f32 2.0, %v331
        %v386 = vsub.f32 2.0, %v336
        %v387 = vsub.f32 2.0, %v341
        %v388 = vsub.f32 2.0, %v346
        %v389 = vsub.f32 2.0, %v351
        %v390 = vsub.f32 2.0, %v356
        %v391 = vsel %vm359, %v375, %v281
        %v392 = vsel %vm360, %v376, %v286
        %v393 = vsel %vm361, %v377, %v291
        %v394 = vsel %vm362, %v378, %v296
        %v395 = vsel %vm363, %v379, %v301
        %v396 = vsel %vm364, %v380, %v306
        %v397 = vsel %vm365, %v381, %v311
        %v398 = vsel %vm366, %v382, %v316
        %v399 = vsel %vm367, %v383, %v321
        %v400 = vsel %vm368, %v384, %v326
        %v401 = vsel %vm369, %v385, %v331
        %v402 = vsel %vm370, %v386, %v336
        %v403 = vsel %vm371, %v387, %v341
        %v404 = vsel %vm372, %v388, %v346
        %v405 = vsel %vm373, %v389, %v351
        %v406 = vsel %vm374, %v390, %v356
        %v407 = vlaneseq
        %v408 = vand.u32 %v407, 127
        %vm409 = vcmp.lt.s32.totalorder %v408, 2
        %v410 = vsel %vm409, %v391, -1e+30
        %v411 = vsel %vm409, %v392, -1e+30
        %v412 = vsel %vm409, %v393, -1e+30
        %v413 = vsel %vm409, %v394, -1e+30
        %v414 = vsel %vm409, %v395, -1e+30
        %v415 = vsel %vm409, %v396, -1e+30
        %v416 = vsel %vm409, %v397, -1e+30
        %v417 = vsel %vm409, %v398, -1e+30
        %v418 = vsel %vm409, %v399, -1e+30
        %v419 = vsel %vm409, %v400, -1e+30
        %v420 = vsel %vm409, %v401, -1e+30
        %v421 = vsel %vm409, %v402, -1e+30
        %v422 = vsel %vm409, %v403, -1e+30
        %v423 = vsel %vm409, %v404, -1e+30
        %v424 = vsel %vm409, %v405, -1e+30
        %v425 = vsel %vm409, %v406, -1e+30
        %426 = vmax.xlane.f32.xlu0 %v410
        %v427 = vpop.xlane.xlu0 %426
        %428 = vmax.xlane.f32.xlu0 %v411
        %v429 = vpop.xlane.xlu0 %428
        %430 = vmax.xlane.f32.xlu0 %v412
        %v431 = vpop.xlane.xlu0 %430
        %432 = vmax.xlane.f32.xlu0 %v413
        %v433 = vpop.xlane.xlu0 %432
        %434 = vmax.xlane.f32.xlu0 %v414
        %v435 = vpop.xlane.xlu0 %434
        %436 = vmax.xlane.f32.xlu0 %v415
        %v437 = vpop.xlane.xlu0 %436
        %438 = vmax.xlane.f32.xlu0 %v416
        %v439 = vpop.xlane.xlu0 %438
        %440 = vmax.xlane.f32.xlu0 %v417
        %v441 = vpop.xlane.xlu0 %440
        %442 = vmax.xlane.f32.xlu0 %v418
        %v443 = vpop.xlane.xlu0 %442
        %444 = vmax.xlane.f32.xlu0 %v419
        %v445 = vpop.xlane.xlu0 %444
        %446 = vmax.xlane.f32.xlu0 %v420
        %v447 = vpop.xlane.xlu0 %446
        %448 = vmax.xlane.f32.xlu0 %v421
        %v449 = vpop.xlane.xlu0 %448
        %450 = vmax.xlane.f32.xlu0 %v422
        %v451 = vpop.xlane.xlu0 %450
        %452 = vmax.xlane.f32.xlu0 %v423
        %v453 = vpop.xlane.xlu0 %452
        %454 = vmax.xlane.f32.xlu0 %v424
        %v455 = vpop.xlane.xlu0 %454
        %456 = vmax.xlane.f32.xlu0 %v425
        %v457 = vpop.xlane.xlu0 %456
        %v458 = vsub.f32 %v410, %v427
        %v459 = vsub.f32 %v411, %v429
        %v460 = vsub.f32 %v412, %v431
        %v461 = vsub.f32 %v413, %v433
        %v462 = vsub.f32 %v414, %v435
        %v463 = vsub.f32 %v415, %v437
        %v464 = vsub.f32 %v416, %v439
        %v465 = vsub.f32 %v417, %v441
        %v466 = vsub.f32 %v418, %v443
        %v467 = vsub.f32 %v419, %v445
        %v468 = vsub.f32 %v420, %v447
        %v469 = vsub.f32 %v421, %v449
        %v470 = vsub.f32 %v422, %v451
        %v471 = vsub.f32 %v423, %v453
        %v472 = vsub.f32 %v424, %v455
        %v473 = vsub.f32 %v425, %v457
        %v474 = vmul.f32 %v458, 1.442695
        %v475 = vpow.pop %v474
        %v476 = vmul.f32 %v459, 1.442695
        %v477 = vpow.pop %v476
        %v478 = vmul.f32 %v460, 1.442695
        %v479 = vpow.pop %v478
        %v480 = vmul.f32 %v461, 1.442695
        %v481 = vpow.pop %v480
        %v482 = vmul.f32 %v462, 1.442695
        %v483 = vpow.pop %v482
        %v484 = vmul.f32 %v463, 1.442695
        %v485 = vpow.pop %v484
        %v486 = vmul.f32 %v464, 1.442695
        %v487 = vpow.pop %v486
        %v488 = vmul.f32 %v465, 1.442695
        %v489 = vpow.pop %v488
        %v490 = vmul.f32 %v466, 1.442695
        %v491 = vpow.pop %v490
        %v492 = vmul.f32 %v467, 1.442695
        %v493 = vpow.pop %v492
        %v494 = vmul.f32 %v468, 1.442695
        %v495 = vpow.pop %v494
        %v496 = vmul.f32 %v469, 1.442695
        %v497 = vpow.pop %v496
        %v498 = vmul.f32 %v470, 1.442695
        %v499 = vpow.pop %v498
        %v500 = vmul.f32 %v471, 1.442695
        %v501 = vpow.pop %v500
        %v502 = vmul.f32 %v472, 1.442695
        %v503 = vpow.pop %v502
        %v504 = vmul.f32 %v473, 1.442695
        %v505 = vpow.pop %v504
        %506 = vadd.xlane.f32.xlu0 %v475
        %v507 = vpop.xlane.xlu0 %506
        %508 = vadd.xlane.f32.xlu0 %v477
        %v509 = vpop.xlane.xlu0 %508
        %510 = vadd.xlane.f32.xlu0 %v479
        %v511 = vpop.xlane.xlu0 %510
        %512 = vadd.xlane.f32.xlu0 %v481
        %v513 = vpop.xlane.xlu0 %512
        %514 = vadd.xlane.f32.xlu0 %v483
        %v515 = vpop.xlane.xlu0 %514
        %516 = vadd.xlane.f32.xlu0 %v485
        %v517 = vpop.xlane.xlu0 %516
        %518 = vadd.xlane.f32.xlu0 %v487
        %v519 = vpop.xlane.xlu0 %518
        %520 = vadd.xlane.f32.xlu0 %v489
        %v521 = vpop.xlane.xlu0 %520
        %522 = vadd.xlane.f32.xlu0 %v491
        %v523 = vpop.xlane.xlu0 %522
        %524 = vadd.xlane.f32.xlu0 %v493
        %v525 = vpop.xlane.xlu0 %524
        %526 = vadd.xlane.f32.xlu0 %v495
        %v527 = vpop.xlane.xlu0 %526
        %528 = vadd.xlane.f32.xlu0 %v497
        %v529 = vpop.xlane.xlu0 %528
        %530 = vadd.xlane.f32.xlu0 %v499
        %v531 = vpop.xlane.xlu0 %530
        %532 = vadd.xlane.f32.xlu0 %v501
        %v533 = vpop.xlane.xlu0 %532
        %534 = vadd.xlane.f32.xlu0 %v503
        %v535 = vpop.xlane.xlu0 %534
        %536 = vadd.xlane.f32.xlu0 %v505
        %v537 = vpop.xlane.xlu0 %536
        %v538 = vrcp.pop %v507
        %v539 = vrcp.pop %v509
        %v540 = vrcp.pop %v511
        %v541 = vrcp.pop %v513
        %v542 = vrcp.pop %v515
        %v543 = vrcp.pop %v517
        %v544 = vrcp.pop %v519
        %v545 = vrcp.pop %v521
        %v546 = vrcp.pop %v523
        %v547 = vrcp.pop %v525
        %v548 = vrcp.pop %v527
        %v549 = vrcp.pop %v529
        %v550 = vrcp.pop %v531
        %v551 = vrcp.pop %v533
        %v552 = vrcp.pop %v535
        %v553 = vrcp.pop %v537
        %v554 = vmul.f32 %v475, %v538
        %v555 = vmul.f32 %v477, %v539
        %v556 = vmul.f32 %v479, %v540
        %v557 = vmul.f32 %v481, %v541
        %v558 = vmul.f32 %v483, %v542
        %v559 = vmul.f32 %v485, %v543
        %v560 = vmul.f32 %v487, %v544
        %v561 = vmul.f32 %v489, %v545
        %v562 = vmul.f32 %v491, %v546
        %v563 = vmul.f32 %v493, %v547
        %v564 = vmul.f32 %v495, %v548
        %v565 = vmul.f32 %v497, %v549
        %v566 = vmul.f32 %v499, %v550
        %v567 = vmul.f32 %v501, %v551
        %v568 = vmul.f32 %v503, %v552
        %v569 = vmul.f32 %v505, %v553
        %570 = vst [vmem:[%s137] sm:$0xff] %v554
        %571 = vst [vmem:[%s137 + $0x8] sm:$0xff] %v555
        %572 = vst [vmem:[%s137 + $0x10] sm:$0xff] %v556
        %573 = vst [vmem:[%s137 + $0x18] sm:$0xff] %v557
        %574 = vst [vmem:[%s137 + $0x20] sm:$0xff] %v558
        %575 = vst [vmem:[%s137 + $0x28] sm:$0xff] %v559
        %576 = vst [vmem:[%s137 + $0x30] sm:$0xff] %v560
        %577 = vst [vmem:[%s137 + $0x38] sm:$0xff] %v561
        %578 = vst [vmem:[%s137 + $0x40] sm:$0xff] %v562
        %579 = vst [vmem:[%s137 + $0x48] sm:$0xff] %v563
        %580 = vst [vmem:[%s137 + $0x50] sm:$0xff] %v564
        %581 = vst [vmem:[%s137 + $0x58] sm:$0xff] %v565
        %582 = vst [vmem:[%s137 + $0x60] sm:$0xff] %v566
        %583 = vst [vmem:[%s137 + $0x68] sm:$0xff] %v567
        %584 = vst [vmem:[%s137 + $0x70] sm:$0xff] %v568
        %585 = vst [vmem:[%s137 + $0x78] sm:$0xff] %v569
        %s586 = sand.u32 %s71, 1
        %s587 = scalar_lea.sflag [#allocation3], %s586
        %s588 = sand.u32 %s71, 1
        %s589 = smul.addr %s588, 128
        %s590 = scalar_lea.vmem [#allocation2], %s589
        // Predicated region
        $region29: #{tpu_custom_call.1} parent=27 // pred_check
          %p591 = pneg %p81
        $region30: #{tpu_custom_call.1} parent=27 // pred_check_branch
          %593 = sbr.rel (%p591) target = $region32
        $region31: #{tpu_custom_call.1} parent=27 // pred_region
          %s594 = smul.u32 16, %s16
          %s596 = ssub.s32 2048, 2048
          %597 = vsyncadd %s587, %s596
          %s598 = smul.addr %s594, 128
          %s599 = scalar_lea.hbm %s2, %s598
          %s600 = sshll.u32 %s590, 4
          %s601 = int_to_ptr.vmem [resolvable:$true] %s600
          %606 = dma.vmem_to_hbm [thread:$0]  %s601, 2048, %s599, %s587, 128, 128, 8
        $region32: #{tpu_custom_call.1} parent=27 // pred_fallthru
          _
      $region28: #{tpu_custom_call.1} parent=5 // pred_fallthru
        _
      %p607 = scmp.le.s32.totalorder 2, %s11
      // Predicated region
      $region33: #{tpu_custom_call.1} parent=5 // pred_check
        %p608 = pneg %p607
      $region34: #{tpu_custom_call.1} parent=5 // pred_check_branch
        %610 = sbr.rel (%p608) target = $region36
      $region35: #{tpu_custom_call.1} parent=5 // pred_region
        %s611 = ssub.s32 %s11, 2
        // Predicated region
        $region37: #{tpu_custom_call.1} parent=35 // pred_check
          %p612 = pneg %p87
        $region38: #{tpu_custom_call.1} parent=35 // pred_check_branch
          %614 = sbr.rel (%p612) target = $region40
        $region39: #{tpu_custom_call.1} parent=35 // pred_region
          %s615 = sand.u32 %s72, 1
          %s616 = scalar_lea.sflag [#allocation3], %s615
          %s617 = sand.u32 %s72, 1
          %s618 = smul.addr %s617, 128
          %s619 = scalar_lea.vmem [#allocation2], %s618
          %620 = dma.done %s616, 2048
        $region40: #{tpu_custom_call.1} parent=35 // pred_fallthru
          _
      $region36: #{tpu_custom_call.1} parent=5 // pred_fallthru
        _
    $region6: #{tpu_custom_call.1} parent=1 // loop_footer
      %s15 = sadd.s32 1, %s11
    $region7: #{tpu_custom_call.1} parent=1 // loop_footer_branch
      %10 = sbr.rel target = $region3
    $region8: #{tpu_custom_call.1} parent=1 // loop_exit
      _
    %621 = vsyncpa [#allocation3], 1
    %s622 = scalar_lea.sflag [#allocation3], 1
    %623 = vsyncpa %s622, 1

</llo_original>
